<compile_context>
chip_gen: v7x
topology: tpu7x:2x2x1
jax: 0.10.0
libtpu: 0.0.40
codegen_flags: <defaults>
</compile_context>

<pallas_src>
import jax
import jax.numpy as jnp
from jax.experimental import pallas as pl
from jax.experimental.pallas import tpu as pltpu


def _round_up(x: int, m: int) -> int:
    return ((x + m - 1) // m) * m


def _vmem_limit_bytes() -> int:
    """Generation-aware VMEM budget: ~75% of physical, capped at 96 MiB."""
    try:
        cap = int(pltpu.get_tpu_info().vmem_capacity_bytes)
    except Exception:
        cap = 64 * 1024 * 1024          # safe default on every generation (v7x = 64 MiB)
    return int(max(16 << 20, min(cap * 3 // 4, 96 << 20)))


# ---------------------------------------------------------------------------
# Path 1: Linear(1, 1)  ->  pure VPU multiply-add (no MXU), batch-tiled grid.
# ---------------------------------------------------------------------------
_LANES = 128
_SCALAR_ROWS_PER_BLOCK = 1024           # 1024 x 128 f32 = 512 KiB per grid step


def _linear_scalar_kernel(x_ref, w_ref, b_ref, o_ref):
    o_ref[...] = x_ref[...] * w_ref[0] + b_ref[0]      # VPU FMA, scalars from SMEM


def _linear_scalar(x, weight, bias):
    B = x.shape[0]
    rows = _round_up(pl.cdiv(B, _LANES), 8)             # lane- and sublane-dense layout
    tr = min(rows, _SCALAR_ROWS_PER_BLOCK)
    rows_p = _round_up(rows, tr)
    Bp = rows_p * _LANES

    xf = x.reshape(B)
    if Bp != B:
        xf = jnp.pad(xf, (0, Bp - B))
    x2 = xf.reshape(rows_p, _LANES)

    y2 = pl.pallas_call(
        _linear_scalar_kernel,
        out_shape=jax.ShapeDtypeStruct((rows_p, _LANES), x.dtype),
        grid=(rows_p // tr,),
        in_specs=[
            pl.BlockSpec((tr, _LANES), lambda i: (i, 0)),
            pl.BlockSpec(memory_space=pltpu.MemorySpace.SMEM),   # scalar weight
            pl.BlockSpec(memory_space=pltpu.MemorySpace.SMEM),   # scalar bias
        ],
        out_specs=pl.BlockSpec((tr, _LANES), lambda i: (i, 0)),
        compiler_params=pltpu.CompilerParams(dimension_semantics=("parallel",)),
    )(x2, weight.reshape(1), bias.reshape(1))
    return y2.reshape(Bp)[:B].reshape(B, 1)


# ---------------------------------------------------------------------------
# Path 2: weight-resident Linear (W^T fits in VMEM) -- fetch W once, stream M.
# ---------------------------------------------------------------------------
def _linear_resident_kernel(x_ref, wt_ref, b_ref, o_ref):
    # x_ref: (tm, Kp), wt_ref: (Kp, Np) resident across the grid, b_ref: (1, Np).
    o_ref[...] = (
        jnp.dot(x_ref[...], wt_ref[...], preferred_element_type=jnp.float32)
        + b_ref[...]
    ).astype(o_ref.dtype)


def _linear_resident(x, weight_t, bias, *, vmem_limit):
    M, K = x.shape
    N = weight_t.shape[1]
    Kp = _round_up(K, 128)
    Np = _round_up(N, 128)
    M8 = _round_up(M, 8)

    # M-tile budget: single resident weight copy + double-buffered x / out tiles.
    budget = (vmem_limit * 6) // 10
    w_bytes = Kp * Np * 4
    per_row = 2 * (Kp + Np) * 4
    tm_cap = max(8, min(2048, ((budget - w_bytes) // per_row) // 8 * 8))

    nblk = max(1, pl.cdiv(M8, tm_cap))
    if nblk == 1 and M8 >= 16:
        nblk = 2                          # >=2 parallel blocks feeds both v7x TensorCores
    tm = _round_up(pl.cdiv(M8, nblk), 8)
    Mp = nblk * tm

    xp = x if (Mp, Kp) == (M, K) else jnp.pad(x, ((0, Mp - M), (0, Kp - K)))
    wtp = weight_t if (Kp, Np) == (K, N) else jnp.pad(
        weight_t, ((0, Kp - K), (0, Np - N)))
    bp = (bias if Np == N else jnp.pad(bias, (0, Np - N))).reshape(1, Np)

    out = pl.pallas_call(
        _linear_resident_kernel,
        out_shape=jax.ShapeDtypeStruct((Mp, Np), x.dtype),
        grid=(nblk,),
        in_specs=[
            pl.BlockSpec((tm, Kp), lambda i: (i, 0)),    # x streamed over M blocks
            pl.BlockSpec((Kp, Np), lambda i: (0, 0)),    # W^T: DMA'd once, stays resident
            pl.BlockSpec((1, Np), lambda i: (0, 0)),     # bias: DMA'd once
        ],
        out_specs=pl.BlockSpec((tm, Np), lambda i: (i, 0)),
        compiler_params=pltpu.CompilerParams(
            dimension_semantics=("parallel",),
            vmem_limit_bytes=int(vmem_limit),
        ),
        cost_estimate=pl.CostEstimate(
            flops=2 * Mp * Np * Kp,
            transcendentals=0,
            bytes_accessed=4 * (Mp * Kp + Kp * Np + Mp * Np + Np),
        ),
    )(xp, wtp, bp)
    return out[:M, :N]


# ---------------------------------------------------------------------------
# Path 3: general tiled fallback (weight too big for VMEM residency).
# ---------------------------------------------------------------------------
def _linear_tiled_kernel_f32(x_ref, wt_ref, b_ref, o_ref):
    # Output dtype is f32 -> its block (constant index over k) is the accumulator.
    @pl.when(pl.program_id(2) == 0)
    def _():
        o_ref[...] = jnp.zeros_like(o_ref) + b_ref[...]      # init with fused bias
    o_ref[...] += jnp.dot(x_ref[...], wt_ref[...], preferred_element_type=jnp.float32)


def _linear_tiled_kernel_acc(x_ref, wt_ref, b_ref, o_ref, acc_ref):
    k = pl.program_id(2)

    @pl.when(k == 0)
    def _():
        acc_ref[...] = jnp.zeros_like(acc_ref) + b_ref[...].astype(jnp.float32)

    acc_ref[...] += jnp.dot(x_ref[...], wt_ref[...], preferred_element_type=jnp.float32)

    @pl.when(k == pl.num_programs(2) - 1)
    def _():
        o_ref[...] = acc_ref[...].astype(o_ref.dtype)


def _pick_tile(dim_p, cap, align):
    """Smallest even split of `dim_p` into tiles <= cap (minimizes padded work)."""
    nblk = max(1, pl.cdiv(dim_p, cap))
    tile = _round_up(pl.cdiv(dim_p, nblk), align)
    return tile, nblk


def _linear_tiled(x, weight_t, bias, *, vmem_limit,
                  tm_max=512, tn_max=512, tk_max=1024):
    M, K = x.shape
    N = weight_t.shape[1]
    M8, N128, K128 = _round_up(M, 8), _round_up(N, 128), _round_up(K, 128)

    tm, mi = _pick_tile(M8, tm_max, 8)
    tn, nj = _pick_tile(N128, tn_max, 128)
    tk, kk = _pick_tile(K128, tk_max, 128)
    if mi == 1 and nj == 1 and M8 >= 16:
        # Guarantee >=2 parallel grid blocks so both v7x TensorCores get work.
        tm = _round_up(pl.cdiv(M8, 2), 8)
        mi = pl.cdiv(M8, tm)
    Mp, Np, Kp = tm * mi, tn * nj, tk * kk

    xp = x if (Mp, Kp) == (M, K) else jnp.pad(x, ((0, Mp - M), (0, Kp - K)))
    wtp = weight_t if (Kp, Np) == (K, N) else jnp.pad(
        weight_t, ((0, Kp - K), (0, Np - N)))
    bp = (bias if Np == N else jnp.pad(bias, (0, Np - N))).reshape(1, Np)

    if x.dtype == jnp.float32:
        kernel, scratch = _linear_tiled_kernel_f32, []      # accumulate in o_ref, no scratch
    else:
        kernel, scratch = _linear_tiled_kernel_acc, [pltpu.VMEM((tm, tn), jnp.float32)]

    out = pl.pallas_call(
        kernel,
        out_shape=jax.ShapeDtypeStruct((Mp, Np), x.dtype),
        grid=(mi, nj, kk),
        in_specs=[
            pl.BlockSpec((tm, tk), lambda i, j, k: (i, k)),   # x tile
            pl.BlockSpec((tk, tn), lambda i, j, k: (k, j)),   # W^T tile (pre-transposed once)
            pl.BlockSpec((1, tn), lambda i, j, k: (0, j)),    # bias tile (const over i, k)
        ],
        out_specs=pl.BlockSpec((tm, tn), lambda i, j, k: (i, j)),
        scratch_shapes=scratch,
        compiler_params=pltpu.CompilerParams(
            dimension_semantics=("parallel", "parallel", "arbitrary"),
            vmem_limit_bytes=int(vmem_limit),
        ),
        cost_estimate=pl.CostEstimate(
            flops=2 * Mp * Np * Kp,
            transcendentals=0,
            # Account for re-streaming: x read once per N block, W once per M block.
            bytes_accessed=4 * (Mp * Kp * nj + Kp * Np * mi + Mp * Np + Np),
        ),
    )(xp, wtp, bp)
    return out[:M, :N]


# ---------------------------------------------------------------------------
# Dispatcher -- Pallas equivalent of PyTorch Net.forward.
# ---------------------------------------------------------------------------
def net_forward(x, weight, bias):
    """y = x @ weight.T + bias.

    x:      (B, n_input)         float32
    weight: (n_output, n_input)  float32  (PyTorch nn.Linear layout, untransposed)
    bias:   (n_output,)          float32
    """
    _, K = x.shape
    N = weight.shape[0]
    if K == 1 and N == 1:
        return _linear_scalar(x, weight, bias)

    vmem_limit = _vmem_limit_bytes()
    # Transpose W once in the wrapper (amortized over all M blocks) so the in-kernel
    # contraction is plain (tm,tk)x(tk,tn) with no per-tile XLU transpose/relayout.
    weight_t = weight.T
    Kp, Np = _round_up(K, 128), _round_up(N, 128)
    if Kp * Np * 4 <= min(vmem_limit // 4, 16 * 1024 * 1024):
        return _linear_resident(x, weight_t, bias, vmem_limit=vmem_limit)
    return _linear_tiled(x, weight_t, bias, vmem_limit=vmem_limit)


if __name__ == "__main__":
    key = jax.random.PRNGKey(0)
    k_x, k_w, k_b, k_x2, k_w2, k_b2 = jax.random.split(key, 6)

    # ---- 1) The module's actual shapes: Linear(1, 1) on the 'rm' feature. ----
    B = 8
    x = jax.random.normal(k_x, (B, 1), dtype=jnp.float32)

    # nn.init.constant_(weight, 0.0) / nn.init.constant_(bias, 0.0)
    weight0 = jnp.zeros((1, 1), dtype=jnp.float32)
    bias0 = jnp.zeros((1,), dtype=jnp.float32)
    y0 = net_forward(x, weight0, bias0)
    jax.block_until_ready(y0)
    assert y0.shape == (B, 1)
    assert jnp.allclose(y0, x @ weight0.T + bias0, atol=1e-6), "zero-init mismatch"

    # Same fast path with non-trivial (post-training) parameters.
    weight1 = jax.random.normal(k_w, (1, 1), dtype=jnp.float32)
    bias1 = jax.random.normal(k_b, (1,), dtype=jnp.float32)
    y1 = net_forward(x, weight1, bias1)
    jax.block_until_ready(y1)
    assert jnp.allclose(y1, x @ weight1.T + bias1, atol=1e-5), "scalar path mismatch"

    # ---- 2) General Linear shapes: weight-resident MXU path + tiled fallback. ----
    M, K, N = 384, 160, 96            # deliberately not tile multiples (tests padding)
    x2 = jax.random.normal(k_x2, (M, K), dtype=jnp.float32)
    w2 = jax.random.normal(k_w2, (N, K), dtype=jnp.float32) / jnp.sqrt(K)
    b2 = jax.random.normal(k_b2, (N,), dtype=jnp.float32)
    y_ref = x2 @ w2.T + b2

    y2 = net_forward(x2, w2, b2)      # small weight -> weight-resident path
    jax.block_until_ready(y2)
    assert y2.shape == (M, N)
    assert jnp.allclose(y2, y_ref, atol=1e-4, rtol=1e-4), "resident path mismatch"

    y3 = _linear_tiled(x2, w2.T, b2, vmem_limit=_vmem_limit_bytes())  # force fallback
    jax.block_until_ready(y3)
    assert jnp.allclose(y3, y_ref, atol=1e-4, rtol=1e-4), "tiled path mismatch"

    print("KERNEL_OK")
</pallas_src>

<mosaic_0001>
module attributes {stable_mosaic.version = 11 : i64} {
  func.func @_linear_scalar_kernel(%arg0: i32, %arg1: memref<8x128xf32, #tpu.memory_space<vmem>>, %arg2: memref<1xf32, #tpu.memory_space<smem>>, %arg3: memref<1xf32, #tpu.memory_space<smem>>, %arg4: memref<8x128xf32, #tpu.memory_space<vmem>>) attributes {dimension_semantics = [#tpu.dimension_semantics<parallel>], iteration_bounds = array<i64: 1>, scalar_prefetch = 0 : i64, scratch_operands = 0 : i64, tpu.core_type = #tpu.core_type<tc>, window_params = [{transform_indices = @transform_0, window_bounds = array<i64: 8, 128>}, {transform_indices = @transform_1, window_bounds = array<i64: 1>}, {transform_indices = @transform_2, window_bounds = array<i64: 1>}, {transform_indices = @transform_3, window_bounds = array<i64: 8, 128>}]} {
    %c0 = arith.constant 0 : index
    %c0_0 = arith.constant 0 : index
    %0 = vector.load %arg1[%c0, %c0_0] : memref<8x128xf32, #tpu.memory_space<vmem>>, vector<8x128xf32>
    %c0_1 = arith.constant 0 : index
    %1 = memref.load %arg2[%c0_1] : memref<1xf32, #tpu.memory_space<smem>>
    %2 = vector.broadcast %1 : f32 to vector<8x128xf32>
    %3 = arith.mulf %0, %2 : vector<8x128xf32>
    %c0_2 = arith.constant 0 : index
    %4 = memref.load %arg3[%c0_2] : memref<1xf32, #tpu.memory_space<smem>>
    %5 = vector.broadcast %4 : f32 to vector<8x128xf32>
    %6 = arith.addf %3, %5 : vector<8x128xf32>
    %c0_3 = arith.constant 0 : index
    %c0_4 = arith.constant 0 : index
    %7 = vector.load %arg4[%c0_3, %c0_4] : memref<8x128xf32, #tpu.memory_space<vmem>>, vector<8x128xf32>
    tpu.vector_store %arg4[%c0_3, %c0_4], %6 {strides = array<i32>} : memref<8x128xf32, #tpu.memory_space<vmem>>, vector<8x128xf32>,
    return
  }
  func.func @transform_0(%arg0: i32) -> (i32, i32) {
    %c0_i32 = arith.constant 0 : i32
    %c0_i32_0 = arith.constant 0 : i32
    return %arg0, %c0_i32 : i32, i32
  }
  func.func @transform_1(%arg0: i32) -> i32 {
    %c0_i32 = arith.constant 0 : i32
    %c0_i32_0 = arith.constant 0 : i32
    return %c0_i32 : i32
  }
  func.func @transform_2(%arg0: i32) -> i32 {
    %c0_i32 = arith.constant 0 : i32
    %c0_i32_0 = arith.constant 0 : i32
    return %c0_i32 : i32
  }
  func.func @transform_3(%arg0: i32) -> (i32, i32) {
    %c0_i32 = arith.constant 0 : i32
    %c0_i32_0 = arith.constant 0 : i32
    return %arg0, %c0_i32 : i32, i32
  }
}

</mosaic_0001>

<llo_original>
// kernel: tpu_custom_call.1
$region0: #{tpu_custom_call.1}
  #allocation0 [shape = 'u32[]', space=smem, size = 0x4, offset = 0x4, fixed_abs, tag = 'smem constant byte address 0x4 - core index']
  #allocation1 [shape = 'u32[144,128]{1,0:T(1,128)}', space=vmem, size = 0x12000, scoped, tag = 'internal scratch']
  #allocation2 [shape = 'f32[1]{0:T(128)S(6)}', space=smem, size = 0x200, scoped, tag = 'scoped memory for tpu_custom_call.1']
  #allocation3 [shape = 'f32[1]{0:T(128)S(6)}', space=smem, size = 0x200, scoped, tag = 'scoped memory for tpu_custom_call.1']
  %s0 = inlined_call_operand.hbm [shape: f32[8,128], index: 0, kind: input, shape index: {}]
  %s1 = inlined_call_operand.<no memory space> [shape: f32[1], index: 1, kind: input, shape index: {}]
  %s2 = inlined_call_operand.<no memory space> [shape: f32[1], index: 2, kind: input, shape index: {}]
  %s3 = inlined_call_operand.hbm [shape: f32[8,128], index: 3, kind: output, shape index: {}]
  %s4 = sld [smem:[#allocation0]]
  $region26: #{tpu_custom_call.1} parent=0
    _
  %s6 = ssub.s32 1, %s4
  %s7 = scalar_select 0, %s6, %s4
  %8 = sst [smem:[#allocation2]] %s1
  %9 = sst [smem:[#allocation3]] %s2
  $region1: #{tpu_custom_call.1} parent=0
    #allocation4 [shape = 'u8[4096]{0}', space=vmem, size = 0x1000, scoped, tag = 'input window, operand 0, single buffered']
    #allocation5 [shape = 's32[1]{0}', space=sflag, size = 0x4, scoped, tag = 'scoped memory for tpu_custom_call.1']
    #allocation6 [shape = 's32[1]{0}', space=sflag, size = 0x4, scoped, tag = 'scoped memory for tpu_custom_call.1']
    #allocation7 [shape = 'u8[4096]{0}', space=vmem, size = 0x1000, scoped, tag = 'output window, operand 0, single buffered']
    %10 = vsyncpa [#allocation5], 0
    %11 = vsyncpa [#allocation6], 0
    // Predicated region
    $region2: #{tpu_custom_call.1} parent=1 // pred_check
      _
    $region3: #{tpu_custom_call.1} parent=1 // pred_check_branch
      %13 = sbr.rel (0) target = $region5
    $region4: #{tpu_custom_call.1} parent=1 // pred_region
      %s15 = ssub.s32 128, 128
      %16 = vsyncadd [#allocation5], %s15
      %s18 = sshll.u32 [#allocation4], 4
      %s19 = int_to_ptr.vmem [resolvable:$true] %s18
      %21 = dma.hbm_to_vmem [thread:$0]  %s0, 128, %s19, [#allocation5]
    $region5: #{tpu_custom_call.1} parent=1 // pred_fallthru
      _
    // Predicated region
    $region6: #{tpu_custom_call.1} parent=1 // pred_check
      _
    $region7: #{tpu_custom_call.1} parent=1 // pred_check_branch
      %23 = sbr.rel (0) target = $region9
    $region8: #{tpu_custom_call.1} parent=1 // pred_region
      _
    $region9: #{tpu_custom_call.1} parent=1 // pred_fallthru
      _
    // Predicated region
    $region10: #{tpu_custom_call.1} parent=1 // pred_check
      _
    $region11: #{tpu_custom_call.1} parent=1 // pred_check_branch
      %25 = sbr.rel (0) target = $region13
    $region12: #{tpu_custom_call.1} parent=1 // pred_region
      _
    $region13: #{tpu_custom_call.1} parent=1 // pred_fallthru
      _
    // Predicated region
    $region14: #{tpu_custom_call.1} parent=1 // pred_check
      _
    $region15: #{tpu_custom_call.1} parent=1 // pred_check_branch
      %27 = sbr.rel (0) target = $region17
    $region16: #{tpu_custom_call.1} parent=1 // pred_region
      %28 = dma.done [#allocation5], 128
    $region17: #{tpu_custom_call.1} parent=1 // pred_fallthru
      _
    %v29 = vld [vmem:[#allocation4] sm:$0xff]
    %s30 = sld [smem:[#allocation2]]
    %v31 = vstv %s30
    %v32 = vmul.f32 %v29, %v31
    %s33 = sld [smem:[#allocation3]]
    %v34 = vstv %s33
    %v35 = vadd.f32 %v32, %v34
    %36 = vst [vmem:[#allocation7] sm:$0xff] %v35
    // Predicated region
    $region18: #{tpu_custom_call.1} parent=1 // pred_check
      _
    $region19: #{tpu_custom_call.1} parent=1 // pred_check_branch
      %38 = sbr.rel (0) target = $region21
    $region20: #{tpu_custom_call.1} parent=1 // pred_region
      %s40 = ssub.s32 128, 128
      %41 = vsyncadd [#allocation6], %s40
      %s43 = sshll.u32 [#allocation7], 4
      %s44 = int_to_ptr.vmem [resolvable:$true] %s43
      %46 = dma.vmem_to_hbm [thread:$0]  %s44, 128, %s3, [#allocation6]
    $region21: #{tpu_custom_call.1} parent=1 // pred_fallthru
      _
    // Predicated region
    $region22: #{tpu_custom_call.1} parent=1 // pred_check
      _
    $region23: #{tpu_custom_call.1} parent=1 // pred_check_branch
      %48 = sbr.rel (0) target = $region25
    $region24: #{tpu_custom_call.1} parent=1 // pred_region
      %49 = dma.done [#allocation6], 128
    $region25: #{tpu_custom_call.1} parent=1 // pred_fallthru
      _
    %50 = vsyncpa [#allocation5], 1
    %51 = vsyncpa [#allocation6], 1

</llo_original>
